<compile_context>
chip_gen: v7x
topology: tpu7x:2x2x1
jax: 0.10.0
libtpu: 0.0.40
codegen_flags: <defaults>
</compile_context>

<pallas_src>
import functools

import jax
import jax.numpy as jnp
from jax.experimental import pallas as pl
from jax.experimental.pallas import tpu as pltpu

_MiB = 1024 * 1024


# --------------------------------------------------------------------------------------
# Kernel
# --------------------------------------------------------------------------------------
def _sgu_kernel(u_ref, v_ref, w_ref, b_ref, gamma_ref, beta_ref, o_ref, vn_ref, *,
                block_batch, gate_dim, gate_pad, eps):
    """One grid step (batch tile b, W-row tile j).

    u_ref  : (bt, tn, GDp) input dtype  - u half, only the tn output sequence rows
    v_ref  : (bt, N,  GDp) input dtype  - v half, all N rows (RHS of the seq-mix matmul)
    w_ref  : (tn, N)       matmul dtype - row tile of the (N, N) spatial projection
    b_ref  : (tn, 1)                     - bias per output sequence row
    gamma_ref, beta_ref : (1, GDp)       - LayerNorm affine params (zero-padded lanes)
    o_ref  : (bt, tn, GDp)
    vn_ref : (N, bt*GDp)   matmul dtype VMEM scratch - LayerNormed v in wide layout
    """
    bt = block_batch
    gdp = gate_pad
    padded = gate_pad != gate_dim

    # ---- LayerNorm(v) once per batch tile (j == 0), cached in VMEM scratch -----------
    @pl.when(pl.program_id(1) == 0)
    def _():
        gamma = gamma_ref[...].astype(jnp.float32)           # (1, GDp)
        beta = beta_ref[...].astype(jnp.float32)
        inv_gd = 1.0 / gate_dim                              # true divisor (ignores pad)
        if padded:
            lane = jax.lax.broadcasted_iota(jnp.int32, (1, gdp), 1)
            pad_mask = lane < gate_dim
        for i in range(bt):                                  # bt is small & static
            v32 = v_ref[i].astype(jnp.float32)               # (N, GDp); pad lanes are 0
            mean = jnp.sum(v32, axis=-1, keepdims=True) * inv_gd
            centered = v32 - mean
            if padded:
                centered = jnp.where(pad_mask, centered, 0.0)
            var = jnp.sum(centered * centered, axis=-1, keepdims=True) * inv_gd
            scale = jax.lax.rsqrt(var + eps) * gamma         # (N, GDp)
            vn = centered * scale + beta                     # pad lanes -> 0
            vn_ref[:, i * gdp:(i + 1) * gdp] = vn.astype(vn_ref.dtype)

    # ---- Sequence mixing: one wide MXU matmul for the whole batch tile ---------------
    vp = jnp.dot(w_ref[...], vn_ref[...],
                 preferred_element_type=jnp.float32)          # (tn, bt*GDp) f32
    vp = vp + b_ref[...].astype(jnp.float32)                  # one broadcast per step

    # ---- Gating: f32 multiply, single downcast at the store --------------------------
    for i in range(bt):
        o_ref[i] = (u_ref[i].astype(jnp.float32)
                    * vp[:, i * gdp:(i + 1) * gdp]).astype(o_ref.dtype)


# --------------------------------------------------------------------------------------
# Tiling heuristics
# --------------------------------------------------------------------------------------
def _round_up(x, m):
    return (x + m - 1) // m * m


def _vmem_budget_and_cap():
    """Generation-aware (budget_for_tiling, physical_capacity) in bytes."""
    cap = 64 * _MiB  # conservative fallback (v7x per-TC)
    try:
        info = pltpu.get_tpu_info()
        cap = int(getattr(info, "vmem_capacity_bytes", None)
                  or getattr(info, "vmem_size_bytes", None) or cap)
    except Exception:
        pass
    # ~96 MiB on 128 MiB chips (v5e/v6e), ~48 MiB on 64 MiB chips (v7x).
    budget = max(16 * _MiB, min(cap - 16 * _MiB, (3 * cap) // 4))
    return budget, cap


def _pick_seq_tile(N, w_row_bytes, budget):
    """Row-tile of W: keep the resident W block well under ~1/3 of the budget."""
    if N * w_row_bytes <= budget // 3:
        return N                                   # whole W resident (common case)
    max_rows = max(8, budget // (3 * 2 * w_row_bytes))   # 2 pipeline buffers when tiled
    cands = [d for d in range(8, N, 8) if N % d == 0 and d <= max_rows]
    return max(cands) if cands else N


def _pick_block_batch(B, n_seq_tiles, per_b_bytes, per_b_stream_bytes, fixed_bytes,
                      budget):
    """Largest divisor of B that fits the budget, keeps streamed blocks ~<=4 MiB and
    keeps >= 4 grid steps (>= 2 per TensorCore on v7x) when the batch allows it."""
    avail = max(budget - fixed_bytes, per_b_bytes)
    cap = max(1, avail // per_b_bytes)
    cap = min(cap, max(1, (4 * _MiB) // max(1, per_b_stream_bytes)))
    need4 = -(-4 // n_seq_tiles)
    need2 = -(-2 // n_seq_tiles)
    if B >= need4:
        cap = min(cap, B // need4)
    elif B >= need2:
        cap = min(cap, B // need2)
    cap = max(1, cap)
    bt = 1
    for d in range(1, B + 1):
        if B % d == 0 and d <= cap:
            bt = d
    return bt


# --------------------------------------------------------------------------------------
# Wrapper
# --------------------------------------------------------------------------------------
def spatial_gating_unit(x, proj_w, proj_b, ln_gamma, ln_beta, *, eps=1e-5,
                        matmul_dtype=None, block_batch=None, block_seq=None,
                        vmem_budget_bytes=None):
    """gMLP SpatialGatingUnit forward.  x: (B, N, D) -> (B, N, D // 2).

    matmul_dtype: optionally run the seq-mix matmul in a narrower dtype (jnp.bfloat16
    hits the native MXU path on v6e/v7x; accumulation stays f32).  Default None keeps
    the stored weight dtype so numerics match the reference module exactly.
    """
    B, N, D = x.shape
    assert D % 2 == 0, "dim must be even (x is chunked into u, v halves)"
    gate_dim = D // 2
    assert proj_w.shape == (N, N)
    assert proj_b.shape == (N,)
    assert ln_gamma.shape == (gate_dim,)
    assert ln_beta.shape == (gate_dim,)

    out_dtype = x.dtype
    x_itemsize = jnp.dtype(x.dtype).itemsize

    mm_dtype = jnp.dtype(matmul_dtype) if matmul_dtype is not None else jnp.dtype(proj_w.dtype)
    if jnp.dtype(proj_w.dtype) != mm_dtype:
        proj_w = proj_w.astype(mm_dtype)           # cast once at the wrapper
    mm_itemsize = mm_dtype.itemsize

    budget, vmem_cap = _vmem_budget_and_cap()
    if vmem_budget_bytes is not None:
        budget = int(vmem_budget_bytes)

    # ---- Lane alignment of the gate axis ---------------------------------------------
    gate_pad = gate_dim if gate_dim % 128 == 0 else _round_up(gate_dim, 128)
    padded = gate_pad != gate_dim
    if padded:
        # Pad u/v halves, gamma, beta to 128 lanes; stats use the true gate_dim divisor
        # and padded lanes are masked, so results are exact.  Output is sliced back.
        pad = gate_pad - gate_dim
        u_in = jnp.pad(x[..., :gate_dim], ((0, 0), (0, 0), (0, pad)))
        v_in = jnp.pad(x[..., gate_dim:], ((0, 0), (0, 0), (0, pad)))
        gamma_in = jnp.pad(ln_gamma, (0, pad))
        beta_in = jnp.pad(ln_beta, (0, pad))
        v_last_block = 0
    else:
        u_in = x                                   # u/v halves split at BlockSpec level
        v_in = x
        gamma_in = ln_gamma
        beta_in = ln_beta
        v_last_block = 1                           # second half of the (..., D) axis

    # ---- Tile sizes --------------------------------------------------------------------
    if block_seq is None:
        tn = _pick_seq_tile(N, N * mm_itemsize, budget)
    else:
        tn = int(block_seq)
    assert N % tn == 0 and (tn == N or tn % 8 == 0)
    n_seq_tiles = N // tn

    per_b_bytes = (2 * tn * gate_pad * x_itemsize          # u block (double buffered)
                   + 2 * N * gate_pad * x_itemsize         # v block (double buffered)
                   + 2 * tn * gate_pad * x_itemsize        # out block (double buffered)
                   + N * gate_pad * mm_itemsize            # vn scratch (single)
                   + tn * gate_pad * 4)                    # wide f32 matmul result
    per_b_stream_bytes = N * gate_pad * x_itemsize
    w_buffers = 1 if n_seq_tiles == 1 else 2
    fixed_bytes = (w_buffers * tn * N * mm_itemsize
                   + 2 * N * gate_pad * 4                  # per-batch f32 LN temporaries
                   + 512 * 1024)

    if block_batch is None:
        bt = _pick_block_batch(B, n_seq_tiles, per_b_bytes, per_b_stream_bytes,
                               fixed_bytes, budget)
    else:
        bt = int(block_batch)
    assert B % bt == 0
    grid = (B // bt, n_seq_tiles)

    est_bytes = fixed_bytes + bt * per_b_bytes
    vmem_limit = int(min(vmem_cap, max(budget, est_bytes + 4 * _MiB)))

    cost = pl.CostEstimate(
        flops=2 * B * N * N * gate_pad,
        transcendentals=B * N,                      # one rsqrt per (batch, seq) row
        bytes_accessed=(B * N * 2 * gate_pad * x_itemsize
                        + N * N * mm_itemsize
                        + B * N * gate_pad * x_itemsize),
    )

    kernel = functools.partial(_sgu_kernel, block_batch=bt, gate_dim=gate_dim,
                               gate_pad=gate_pad, eps=eps)

    def _specs(single_buffer_hint):
        def inv(shape, index_map):
            # Grid-invariant operand: single buffer saves VMEM (copy already elided).
            if single_buffer_hint:
                return pl.BlockSpec(shape, index_map, pipeline_mode=pl.Buffered(1))
            return pl.BlockSpec(shape, index_map)

        u_spec = pl.BlockSpec((bt, tn, gate_pad), lambda b, j: (b, j, 0))
        v_spec = pl.BlockSpec((bt, N, gate_pad), lambda b, j: (b, 0, v_last_block))
        if n_seq_tiles == 1:
            w_spec = inv((tn, N), lambda b, j: (0, 0))
            bias_spec = inv((tn, 1), lambda b, j: (0, 0))
        else:
            w_spec = pl.BlockSpec((tn, N), lambda b, j: (j, 0))
            bias_spec = pl.BlockSpec((tn, 1), lambda b, j: (j, 0))
        g_spec = inv((1, gate_pad), lambda b, j: (0, 0))
        be_spec = inv((1, gate_pad), lambda b, j: (0, 0))
        out_spec = pl.BlockSpec((bt, tn, gate_pad), lambda b, j: (b, j, 0))
        return [u_spec, v_spec, w_spec, bias_spec, g_spec, be_spec], out_spec

    def _call(single_buffer_hint):
        in_specs, out_spec = _specs(single_buffer_hint)
        return pl.pallas_call(
            kernel,
            out_shape=jax.ShapeDtypeStruct((B, N, gate_pad), out_dtype),
            grid_spec=pltpu.PrefetchScalarGridSpec(
                num_scalar_prefetch=0,
                grid=grid,
                in_specs=in_specs,
                out_specs=out_spec,
                scratch_shapes=[pltpu.VMEM((N, bt * gate_pad), mm_dtype)],
            ),
            compiler_params=pltpu.CompilerParams(
                dimension_semantics=("parallel", "arbitrary"),
                vmem_limit_bytes=vmem_limit,
            ),
            cost_estimate=cost,
        )(u_in, v_in, proj_w, proj_b.reshape(N, 1),
          gamma_in.reshape(1, gate_pad), beta_in.reshape(1, gate_pad))

    try:
        out = _call(True)
    except Exception:
        # pl.Buffered(1) single-buffer hint not accepted on this jax version; the hint is
        # a pure VMEM optimization, so retry with default double buffering.
        out = _call(False)

    if padded:
        out = out[..., :gate_dim]
    return out


# --------------------------------------------------------------------------------------
# Plain-JAX reference (mirrors the PyTorch forward in f32)
# --------------------------------------------------------------------------------------
def spatial_gating_unit_ref(x, proj_w, proj_b, ln_gamma, ln_beta, *, eps=1e-5):
    x = x.astype(jnp.float32)
    gate_dim = x.shape[-1] // 2
    u, v = x[..., :gate_dim], x[..., gate_dim:]
    mean = jnp.mean(v, axis=-1, keepdims=True)
    var = jnp.mean((v - mean) ** 2, axis=-1, keepdims=True)
    v = (v - mean) / jnp.sqrt(var + eps) * ln_gamma.astype(jnp.float32) \
        + ln_beta.astype(jnp.float32)
    v = jnp.einsum('mn,bng->bmg', proj_w.astype(jnp.float32), v,
                   precision=jax.lax.Precision.HIGHEST) \
        + proj_b.astype(jnp.float32)[None, :, None]
    return u * v


# --------------------------------------------------------------------------------------
# Self-test
# --------------------------------------------------------------------------------------
if __name__ == "__main__":
    def _run_case(B, N, D, *, weight_scale, x_dtype=jnp.float32, matmul_dtype=None,
                  block_seq=None, atol, rtol):
        gate_dim = D // 2
        key = jax.random.PRNGKey(0)
        kx, kw, kb, kg, ke = jax.random.split(key, 5)
        x = jax.random.normal(kx, (B, N, D), dtype=jnp.float32).astype(x_dtype)
        if weight_scale < 1e-3:
            # Module init_weights(): W ~ N(0, 1e-6), bias = 1, gamma = 1, beta = 0.
            proj_w = weight_scale * jax.random.normal(kw, (N, N), dtype=jnp.float32)
            proj_b = jnp.ones((N,), jnp.float32)
            ln_gamma = jnp.ones((gate_dim,), jnp.float32)
            ln_beta = jnp.zeros((gate_dim,), jnp.float32)
        else:
            # O(1) weights so the matmul / transpose orientation is actually exercised.
            proj_w = weight_scale * jax.random.normal(kw, (N, N), dtype=jnp.float32)
            proj_b = jax.random.normal(kb, (N,), dtype=jnp.float32)
            ln_gamma = 1.0 + 0.1 * jax.random.normal(kg, (gate_dim,), dtype=jnp.float32)
            ln_beta = 0.1 * jax.random.normal(ke, (gate_dim,), dtype=jnp.float32)

        out = spatial_gating_unit(x, proj_w, proj_b, ln_gamma, ln_beta,
                                  matmul_dtype=matmul_dtype, block_seq=block_seq)
        out = jax.block_until_ready(out)
        assert out.shape == (B, N, gate_dim)
        ref = spatial_gating_unit_ref(x, proj_w, proj_b, ln_gamma, ln_beta)
        ok = jnp.allclose(out.astype(jnp.float32), ref, atol=atol, rtol=rtol)
        assert ok, (f"mismatch B={B} N={N} D={D} dtype={x_dtype} "
                    f"max_err={float(jnp.max(jnp.abs(out.astype(jnp.float32) - ref)))}")

    # 1. Module-init weights (std=1e-6), gate_dim=128 -> lane-aligned fast path.
    _run_case(2, 8, 256, weight_scale=1e-6, atol=1e-5, rtol=1e-4)
    # 2. O(1) weights + forced W row-tiling (block_seq=8 -> 2-axis grid, LN cached).
    _run_case(2, 16, 256, weight_scale=1.0, block_seq=8, atol=2e-2, rtol=2e-2)
    # 3. gate_dim=32 (not a multiple of 128) -> zero-padded lane-dense path.
    _run_case(2, 8, 64, weight_scale=1.0, atol=2e-2, rtol=2e-2)
    # 4. bf16 activations + bf16 MXU matmul path (f32 accumulation).
    _run_case(2, 16, 256, weight_scale=1.0, x_dtype=jnp.bfloat16,
              matmul_dtype=jnp.bfloat16, atol=1e-1, rtol=1e-1)

    print("KERNEL_OK")
</pallas_src>

<mosaic_0001>
module attributes {stable_mosaic.version = 11 : i64} {
  func.func @_sgu_kernel(%arg0: i32, %arg1: i32, %arg2: memref<1x8x128xf32, #tpu.memory_space<vmem>>, %arg3: memref<1x8x128xf32, #tpu.memory_space<vmem>>, %arg4: memref<8x8xf32, #tpu.memory_space<vmem>>, %arg5: memref<8x1xf32, #tpu.memory_space<vmem>>, %arg6: memref<1x128xf32, #tpu.memory_space<vmem>>, %arg7: memref<1x128xf32, #tpu.memory_space<vmem>>, %arg8: memref<1x8x128xf32, #tpu.memory_space<vmem>>, %arg9: memref<8x128xf32, #tpu.memory_space<vmem>>) attributes {dimension_semantics = [#tpu.dimension_semantics<parallel>, #tpu.dimension_semantics<arbitrary>], iteration_bounds = array<i64: 2, 1>, scalar_prefetch = 0 : i64, scratch_operands = 1 : i64, tpu.core_type = #tpu.core_type<tc>, window_params = [{transform_indices = @transform_0, window_bounds = array<i64: 1, 8, 128>}, {transform_indices = @transform_1, window_bounds = array<i64: 1, 8, 128>}, {pipeline_mode = #tpu.pipeline_mode<synchronous>, transform_indices = @transform_2, window_bounds = array<i64: 8, 8>}, {pipeline_mode = #tpu.pipeline_mode<synchronous>, transform_indices = @transform_3, window_bounds = array<i64: 8, 1>}, {pipeline_mode = #tpu.pipeline_mode<synchronous>, transform_indices = @transform_4, window_bounds = array<i64: 1, 128>}, {pipeline_mode = #tpu.pipeline_mode<synchronous>, transform_indices = @transform_5, window_bounds = array<i64: 1, 128>}, {transform_indices = @transform_6, window_bounds = array<i64: 1, 8, 128>}]} {
    %c0_i32 = arith.constant 0 : i32
    %0 = arith.cmpi eq, %arg1, %c0_i32 : i32
    %1 = arith.extui %0 : i1 to i32
    %c0_i32_0 = arith.constant 0 : i32
    %2 = arith.cmpi ne, %1, %c0_i32_0 : i32
    scf.if %2 {
      %c0_12 = arith.constant 0 : index
      %c0_13 = arith.constant 0 : index
      %15 = vector.load %arg6[%c0_12, %c0_13] : memref<1x128xf32, #tpu.memory_space<vmem>>, vector<1x128xf32>
      %c0_14 = arith.constant 0 : index
      %c0_15 = arith.constant 0 : index
      %16 = vector.load %arg7[%c0_14, %c0_15] : memref<1x128xf32, #tpu.memory_space<vmem>>, vector<1x128xf32>
      %c0_16 = arith.constant 0 : index
      %c0_17 = arith.constant 0 : index
      %c0_18 = arith.constant 0 : index
      %17 = vector.load %arg3[%c0_16, %c0_17, %c0_18] : memref<1x8x128xf32, #tpu.memory_space<vmem>>, vector<1x8x128xf32>
      %18 = vector.shape_cast %17 : vector<1x8x128xf32> to vector<8x128xf32>
      %cst_19 = arith.constant dense<0.000000e+00> : vector<8xf32>
      %19 = vector.multi_reduction <add>, %18, %cst_19 [1] : vector<8x128xf32> to vector<8xf32>
      %20 = vector.shape_cast %19 : vector<8xf32> to vector<8x1xf32>
      %cst_20 = arith.constant 7.812500e-03 : f32
      %21 = vector.broadcast %cst_20 : f32 to vector<8x1xf32>
      %22 = arith.mulf %20, %21 : vector<8x1xf32>
      %23 = vector.broadcast %22 : vector<8x1xf32> to vector<8x128xf32>
      %24 = arith.subf %18, %23 : vector<8x128xf32>
      %25 = arith.mulf %24, %24 : vector<8x128xf32>
      %cst_21 = arith.constant dense<0.000000e+00> : vector<8xf32>
      %26 = vector.multi_reduction <add>, %25, %cst_21 [1] : vector<8x128xf32> to vector<8xf32>
      %27 = vector.shape_cast %26 : vector<8xf32> to vector<8x1xf32>
      %cst_22 = arith.constant 7.812500e-03 : f32
      %28 = vector.broadcast %cst_22 : f32 to vector<8x1xf32>
      %29 = arith.mulf %27, %28 : vector<8x1xf32>
      %cst_23 = arith.constant 9.99999974E-6 : f32
      %30 = vector.broadcast %cst_23 : f32 to vector<8x1xf32>
      %31 = arith.addf %29, %30 : vector<8x1xf32>
      %32 = math.rsqrt %31 : vector<8x1xf32>
      %33 = vector.broadcast %32 : vector<8x1xf32> to vector<8x128xf32>
      %34 = vector.broadcast %15 : vector<1x128xf32> to vector<8x128xf32>
      %35 = arith.mulf %33, %34 : vector<8x128xf32>
      %36 = arith.mulf %24, %35 : vector<8x128xf32>
      %37 = vector.broadcast %16 : vector<1x128xf32> to vector<8x128xf32>
      %38 = arith.addf %36, %37 : vector<8x128xf32>
      %c0_24 = arith.constant 0 : index
      %c0_25 = arith.constant 0 : index
      %39 = vector.load %arg9[%c0_24, %c0_25] : memref<8x128xf32, #tpu.memory_space<vmem>>, vector<8x128xf32>
      tpu.vector_store %arg9[%c0_24, %c0_25], %38 {strides = array<i32>} : memref<8x128xf32, #tpu.memory_space<vmem>>, vector<8x128xf32>,
    } else {
    }
    %c0 = arith.constant 0 : index
    %c0_1 = arith.constant 0 : index
    %3 = vector.load %arg4[%c0, %c0_1] : memref<8x8xf32, #tpu.memory_space<vmem>>, vector<8x8xf32>
    %c0_2 = arith.constant 0 : index
    %c0_3 = arith.constant 0 : index
    %4 = vector.load %arg9[%c0_2, %c0_3] : memref<8x128xf32, #tpu.memory_space<vmem>>, vector<8x128xf32>
    %cst = arith.constant dense<0.000000e+00> : vector<8x128xf32>
    %5 = tpu.matmul %3, %4, %cst {dimension_numbers = #tpu.dot_dimension_numbers<[1], [0], [0], [1], [0, 0, 1, 1], [], []>} : vector<8x8xf32>, vector<8x128xf32>, vector<8x128xf32> -> vector<8x128xf32>
    %c0_4 = arith.constant 0 : index
    %c0_5 = arith.constant 0 : index
    %6 = vector.load %arg5[%c0_4, %c0_5] : memref<8x1xf32, #tpu.memory_space<vmem>>, vector<8x1xf32>
    %7 = vector.broadcast %6 : vector<8x1xf32> to vector<8x128xf32>
    %8 = arith.addf %5, %7 : vector<8x128xf32>
    %c0_6 = arith.constant 0 : index
    %c0_7 = arith.constant 0 : index
    %c0_8 = arith.constant 0 : index
    %9 = vector.load %arg2[%c0_6, %c0_7, %c0_8] : memref<1x8x128xf32, #tpu.memory_space<vmem>>, vector<1x8x128xf32>
    %10 = vector.shape_cast %9 : vector<1x8x128xf32> to vector<8x128xf32>
    %11 = arith.mulf %10, %8 : vector<8x128xf32>
    %c0_9 = arith.constant 0 : index
    %c0_10 = arith.constant 0 : index
    %c0_11 = arith.constant 0 : index
    %12 = vector.load %arg8[%c0_9, %c0_10, %c0_11] : memref<1x8x128xf32, #tpu.memory_space<vmem>>, vector<1x8x128xf32>
    %13 = vector.shape_cast %12 : vector<1x8x128xf32> to vector<8x128xf32>
    %14 = vector.shape_cast %11 : vector<8x128xf32> to vector<1x8x128xf32>
    tpu.vector_store %arg8[%c0_9, %c0_10, %c0_11], %14 {strides = array<i32>} : memref<1x8x128xf32, #tpu.memory_space<vmem>>, vector<1x8x128xf32>,
    return
  }
  func.func @transform_0(%arg0: i32, %arg1: i32) -> (i32, i32, i32) {
    %c0_i32 = arith.constant 0 : i32
    %c0_i32_0 = arith.constant 0 : i32
    return %arg0, %arg1, %c0_i32 : i32, i32, i32
  }
  func.func @transform_1(%arg0: i32, %arg1: i32) -> (i32, i32, i32) {
    %c0_i32 = arith.constant 0 : i32
    %c1_i32 = arith.constant 1 : i32
    %c0_i32_0 = arith.constant 0 : i32
    return %arg0, %c0_i32, %c1_i32 : i32, i32, i32
  }
  func.func @transform_2(%arg0: i32, %arg1: i32) -> (i32, i32) {
    %c0_i32 = arith.constant 0 : i32
    %c0_i32_0 = arith.constant 0 : i32
    %c0_i32_1 = arith.constant 0 : i32
    return %c0_i32, %c0_i32_0 : i32, i32
  }
  func.func @transform_3(%arg0: i32, %arg1: i32) -> (i32, i32) {
    %c0_i32 = arith.constant 0 : i32
    %c0_i32_0 = arith.constant 0 : i32
    %c0_i32_1 = arith.constant 0 : i32
    return %c0_i32, %c0_i32_0 : i32, i32
  }
  func.func @transform_4(%arg0: i32, %arg1: i32) -> (i32, i32) {
    %c0_i32 = arith.constant 0 : i32
    %c0_i32_0 = arith.constant 0 : i32
    %c0_i32_1 = arith.constant 0 : i32
    return %c0_i32, %c0_i32_0 : i32, i32
  }
  func.func @transform_5(%arg0: i32, %arg1: i32) -> (i32, i32) {
    %c0_i32 = arith.constant 0 : i32
    %c0_i32_0 = arith.constant 0 : i32
    %c0_i32_1 = arith.constant 0 : i32
    return %c0_i32, %c0_i32_0 : i32, i32
  }
  func.func @transform_6(%arg0: i32, %arg1: i32) -> (i32, i32, i32) {
    %c0_i32 = arith.constant 0 : i32
    %c0_i32_0 = arith.constant 0 : i32
    return %arg0, %arg1, %c0_i32 : i32, i32, i32
  }
}

module attributes {stable_mosaic.version = 11 : i64} {
  func.func @_sgu_kernel(%arg0: i32, %arg1: i32, %arg2: memref<1x8x128xf32, #tpu.memory_space<vmem>>, %arg3: memref<1x8x128xf32, #tpu.memory_space<vmem>>, %arg4: memref<8x8xf32, #tpu.memory_space<vmem>>, %arg5: memref<8x1xf32, #tpu.memory_space<vmem>>, %arg6: memref<1x128xf32, #tpu.memory_space<vmem>>, %arg7: memref<1x128xf32, #tpu.memory_space<vmem>>, %arg8: memref<1x8x128xf32, #tpu.memory_space<vmem>>, %arg9: memref<8x128xf32, #tpu.memory_space<vmem>>) attributes {dimension_semantics = [#tpu.dimension_semantics<parallel>, #tpu.dimension_semantics<arbitrary>], iteration_bounds = array<i64: 2, 1>, scalar_prefetch = 0 : i64, scratch_operands = 1 : i64, tpu.core_type = #tpu.core_type<tc>, window_params = [{transform_indices = @transform_0, window_bounds = array<i64: 1, 8, 128>}, {transform_indices = @transform_1, window_bounds = array<i64: 1, 8, 128>}, {pipeline_mode = #tpu.pipeline_mode<synchronous>, transform_indices = @transform_2, window_bounds = array<i64: 8, 8>}, {pipeline_mode = #tpu.pipeline_mode<synchronous>, transform_indices = @transform_3, window_bounds = array<i64: 8, 1>}, {pipeline_mode = #tpu.pipeline_mode<synchronous>, transform_indices = @transform_4, window_bounds = array<i64: 1, 128>}, {pipeline_mode = #tpu.pipeline_mode<synchronous>, transform_indices = @transform_5, window_bounds = array<i64: 1, 128>}, {transform_indices = @transform_6, window_bounds = array<i64: 1, 8, 128>}]} {
    %c0_i32 = arith.constant 0 : i32
    %0 = arith.cmpi eq, %arg1, %c0_i32 : i32
    %1 = arith.extui %0 : i1 to i32
    %c0_i32_0 = arith.constant 0 : i32
    %2 = arith.cmpi ne, %1, %c0_i32_0 : i32
    scf.if %2 {
      %c0_12 = arith.constant 0 : index
      %c0_13 = arith.constant 0 : index
      %15 = vector.load %arg6[%c0_12, %c0_13] : memref<1x128xf32, #tpu.memory_space<vmem>>, vector<1x128xf32>
      %c0_14 = arith.constant 0 : index
      %c0_15 = arith.constant 0 : index
      %16 = vector.load %arg7[%c0_14, %c0_15] : memref<1x128xf32, #tpu.memory_space<vmem>>, vector<1x128xf32>
      %c0_16 = arith.constant 0 : index
      %c0_17 = arith.constant 0 : index
      %c0_18 = arith.constant 0 : index
      %17 = vector.load %arg3[%c0_16, %c0_17, %c0_18] : memref<1x8x128xf32, #tpu.memory_space<vmem>>, vector<1x8x128xf32>
      %18 = vector.shape_cast %17 : vector<1x8x128xf32> to vector<8x128xf32>
      %cst_19 = arith.constant dense<0.000000e+00> : vector<8xf32>
      %19 = vector.multi_reduction <add>, %18, %cst_19 [1] : vector<8x128xf32> to vector<8xf32>
      %20 = vector.shape_cast %19 : vector<8xf32> to vector<8x1xf32>
      %cst_20 = arith.constant 7.812500e-03 : f32
      %21 = vector.broadcast %cst_20 : f32 to vector<8x1xf32>
      %22 = arith.mulf %20, %21 : vector<8x1xf32>
      %23 = vector.broadcast %22 : vector<8x1xf32> to vector<8x128xf32>
      %24 = arith.subf %18, %23 : vector<8x128xf32>
      %25 = arith.mulf %24, %24 : vector<8x128xf32>
      %cst_21 = arith.constant dense<0.000000e+00> : vector<8xf32>
      %26 = vector.multi_reduction <add>, %25, %cst_21 [1] : vector<8x128xf32> to vector<8xf32>
      %27 = vector.shape_cast %26 : vector<8xf32> to vector<8x1xf32>
      %cst_22 = arith.constant 7.812500e-03 : f32
      %28 = vector.broadcast %cst_22 : f32 to vector<8x1xf32>
      %29 = arith.mulf %27, %28 : vector<8x1xf32>
      %cst_23 = arith.constant 9.99999974E-6 : f32
      %30 = vector.broadcast %cst_23 : f32 to vector<8x1xf32>
      %31 = arith.addf %29, %30 : vector<8x1xf32>
      %32 = math.rsqrt %31 : vector<8x1xf32>
      %33 = vector.broadcast %32 : vector<8x1xf32> to vector<8x128xf32>
      %34 = vector.broadcast %15 : vector<1x128xf32> to vector<8x128xf32>
      %35 = arith.mulf %33, %34 : vector<8x128xf32>
      %36 = arith.mulf %24, %35 : vector<8x128xf32>
      %37 = vector.broadcast %16 : vector<1x128xf32> to vector<8x128xf32>
      %38 = arith.addf %36, %37 : vector<8x128xf32>
      %c0_24 = arith.constant 0 : index
      %c0_25 = arith.constant 0 : index
      %39 = vector.load %arg9[%c0_24, %c0_25] : memref<8x128xf32, #tpu.memory_space<vmem>>, vector<8x128xf32>
      tpu.vector_store %arg9[%c0_24, %c0_25], %38 {strides = array<i32>} : memref<8x128xf32, #tpu.memory_space<vmem>>, vector<8x128xf32>,
    } else {
    }
    %c0 = arith.constant 0 : index
    %c0_1 = arith.constant 0 : index
    %3 = vector.load %arg4[%c0, %c0_1] : memref<8x8xf32, #tpu.memory_space<vmem>>, vector<8x8xf32>
    %c0_2 = arith.constant 0 : index
    %c0_3 = arith.constant 0 : index
    %4 = vector.load %arg9[%c0_2, %c0_3] : memref<8x128xf32, #tpu.memory_space<vmem>>, vector<8x128xf32>
    %cst = arith.constant dense<0.000000e+00> : vector<8x128xf32>
    %5 = tpu.matmul %3, %4, %cst {dimension_numbers = #tpu.dot_dimension_numbers<[1], [0], [0], [1], [0, 0, 1, 1], [], []>} : vector<8x8xf32>, vector<8x128xf32>, vector<8x128xf32> -> vector<8x128xf32>
    %c0_4 = arith.constant 0 : index
    %c0_5 = arith.constant 0 : index
    %6 = vector.load %arg5[%c0_4, %c0_5] : memref<8x1xf32, #tpu.memory_space<vmem>>, vector<8x1xf32>
    %7 = vector.broadcast %6 : vector<8x1xf32> to vector<8x128xf32>
    %8 = arith.addf %5, %7 : vector<8x128xf32>
    %c0_6 = arith.constant 0 : index
    %c0_7 = arith.constant 0 : index
    %c0_8 = arith.constant 0 : index
    %9 = vector.load %arg2[%c0_6, %c0_7, %c0_8] : memref<1x8x128xf32, #tpu.memory_space<vmem>>, vector<1x8x128xf32>
    %10 = vector.shape_cast %9 : vector<1x8x128xf32> to vector<8x128xf32>
    %11 = arith.mulf %10, %8 : vector<8x128xf32>
    %c0_9 = arith.constant 0 : index
    %c0_10 = arith.constant 0 : index
    %c0_11 = arith.constant 0 : index
    %12 = vector.load %arg8[%c0_9, %c0_10, %c0_11] : memref<1x8x128xf32, #tpu.memory_space<vmem>>, vector<1x8x128xf32>
    %13 = vector.shape_cast %12 : vector<1x8x128xf32> to vector<8x128xf32>
    %14 = vector.shape_cast %11 : vector<8x128xf32> to vector<1x8x128xf32>
    tpu.vector_store %arg8[%c0_9, %c0_10, %c0_11], %14 {strides = array<i32>} : memref<1x8x128xf32, #tpu.memory_space<vmem>>, vector<1x8x128xf32>,
    return
  }
  func.func @transform_0(%arg0: i32, %arg1: i32) -> (i32, i32, i32) {
    %c0_i32 = arith.constant 0 : i32
    %c0_i32_0 = arith.constant 0 : i32
    return %arg0, %arg1, %c0_i32 : i32, i32, i32
  }
  func.func @transform_1(%arg0: i32, %arg1: i32) -> (i32, i32, i32) {
    %c0_i32 = arith.constant 0 : i32
    %c1_i32 = arith.constant 1 : i32
    %c0_i32_0 = arith.constant 0 : i32
    return %arg0, %c0_i32, %c1_i32 : i32, i32, i32
  }
  func.func @transform_2(%arg0: i32, %arg1: i32) -> (i32, i32) {
    %c0_i32 = arith.constant 0 : i32
    %c0_i32_0 = arith.constant 0 : i32
    %c0_i32_1 = arith.constant 0 : i32
    return %c0_i32, %c0_i32_0 : i32, i32
  }
  func.func @transform_3(%arg0: i32, %arg1: i32) -> (i32, i32) {
    %c0_i32 = arith.constant 0 : i32
    %c0_i32_0 = arith.constant 0 : i32
    %c0_i32_1 = arith.constant 0 : i32
    return %c0_i32, %c0_i32_0 : i32, i32
  }
  func.func @transform_4(%arg0: i32, %arg1: i32) -> (i32, i32) {
    %c0_i32 = arith.constant 0 : i32
    %c0_i32_0 = arith.constant 0 : i32
    %c0_i32_1 = arith.constant 0 : i32
    return %c0_i32, %c0_i32_0 : i32, i32
  }
  func.func @transform_5(%arg0: i32, %arg1: i32) -> (i32, i32) {
    %c0_i32 = arith.constant 0 : i32
    %c0_i32_0 = arith.constant 0 : i32
    %c0_i32_1 = arith.constant 0 : i32
    return %c0_i32, %c0_i32_0 : i32, i32
  }
  func.func @transform_6(%arg0: i32, %arg1: i32) -> (i32, i32, i32) {
    %c0_i32 = arith.constant 0 : i32
    %c0_i32_0 = arith.constant 0 : i32
    return %arg0, %arg1, %c0_i32 : i32, i32, i32
  }
}

</mosaic_0001>

<llo_original>
// kernel: tpu_custom_call.1
$region0: #{tpu_custom_call.1}
  #allocation0 [shape = 'u32[]', space=smem, size = 0x4, offset = 0x4, fixed_abs, tag = 'smem constant byte address 0x4 - core index']
  #allocation1 [shape = 'u32[144,128]{1,0:T(1,128)}', space=vmem, size = 0x12000, scoped, tag = 'internal scratch']
  #allocation2 [shape = 'f32[8,128]{1,0:T(8,128)}', space=vmem, size = 0x1000, scoped, tag = 'scratch operand']
  %s0 = inlined_call_operand.hbm [shape: f32[2,8,256], index: 0, kind: input, shape index: {}]
  %s1 = inlined_call_operand.hbm [shape: f32[2,8,256], index: 1, kind: input, shape index: {}]
  %s2 = inlined_call_operand.vmem [shape: f32[8,8], index: 2, kind: input, shape index: {}]
  %s3 = inlined_call_operand.vmem [shape: f32[8,1], index: 3, kind: input, shape index: {}]
  %s4 = inlined_call_operand.vmem [shape: f32[1,128], index: 4, kind: input, shape index: {}]
  %s5 = inlined_call_operand.vmem [shape: f32[1,128], index: 5, kind: input, shape index: {}]
  %s6 = inlined_call_operand.hbm [shape: f32[2,8,128], index: 6, kind: output, shape index: {}]
  %s7 = sld [smem:[#allocation0]]
  $region69: #{tpu_custom_call.1} parent=0
    _
  %s9 = ssub.s32 1, %s7
  %s10 = scalar_select 0, %s9, %s7
  $region1: #{tpu_custom_call.1} parent=0
    #allocation3 [shape = 'u8[8192]{0}', space=vmem, size = 0x2000, scoped, tag = 'input window, operand 0']
    #allocation4 [shape = 's32[2]{0}', space=sflag, size = 0x8, scoped, tag = 'scoped memory for tpu_custom_call.1']
    #allocation5 [shape = 's32[2]{0}', space=sflag, size = 0x8, scoped, tag = 'scoped memory for tpu_custom_call.1']
    #allocation6 [shape = 'u8[8192]{0}', space=vmem, size = 0x2000, scoped, tag = 'input window, operand 1']
    #allocation7 [shape = 's32[2]{0}', space=sflag, size = 0x8, scoped, tag = 'scoped memory for tpu_custom_call.1']
    #allocation8 [shape = 'u8[8192]{0}', space=vmem, size = 0x2000, scoped, tag = 'output window, operand 0']
    %11 = vsyncpa [#allocation4], 0
    %s12 = scalar_lea.sflag [#allocation4], 1
    %13 = vsyncpa %s12, 0
    %14 = vsyncpa [#allocation7], 0
    %s15 = scalar_lea.sflag [#allocation7], 1
    %16 = vsyncpa %s15, 0
    %17 = vsyncpa [#allocation5], 0
    %s18 = scalar_lea.sflag [#allocation5], 1
    %19 = vsyncpa %s18, 0
    loop: start=0, step=1, limit=4
    $region2: #{tpu_custom_call.1} parent=1 // loop_pre_header
      _
    $region3: #{tpu_custom_call.1} parent=1 // loop_header
      %s21 = sphi 0, %s25
      %p22 = scmp.ge.s32.totalorder %s21, 4
      %s28 = sphi 0, %s40
      %s29 = sphi 0, %s36
      %s30 = sphi 0, %s28
      %s31 = sphi 0, %s29
      %s32 = sphi 0, %s30
      %s33 = sphi 0, %s31
      %s45 = sphi 0, %s47
      %s48 = sphi 0, %s45
      %s49 = sphi 0, %s48
      %s65 = sphi 0, %s49
      %s71 = sphi 0, %s73
      %s74 = sphi 0, %s71
      %s75 = sphi 0, %s74
      %s91 = sphi 0, %s75
      %s95 = sphi 0, %s95
      %s97 = sphi 0, %s95
      %s98 = sphi 0, %s97
      %s112 = sphi 0, %s98
      %s116 = sphi 0, %s116
      %s118 = sphi 0, %s116
      %s119 = sphi 0, %s118
      %s133 = sphi 0, %s119
      %s137 = sphi 0, %s137
      %s139 = sphi 0, %s137
      %s140 = sphi 0, %s139
      %s154 = sphi 0, %s140
      %s158 = sphi 0, %s158
      %s160 = sphi 0, %s158
      %s161 = sphi 0, %s160
      %s175 = sphi 0, %s161
      %s183 = sphi 0, %s185
      %s186 = sphi 0, %s183
      %s187 = sphi 0, %s186
      %s203 = sphi 0, %s187
    $region4: #{tpu_custom_call.1} parent=1 // loop_header_branch
      %24 = sbr.rel (%p22) target = $region8
    $region5: #{tpu_custom_call.1} parent=1 // loop_body
      %s26 = ssub.s32 %s21, 1
      %s27 = ssub.s32 %s21, 2
      %s34 = sadd.s32 1, %s29
      %p35 = scmp.ge.s32.totalorder %s34, 1
      %s36 = scalar_select %p35, 0, %s34
      %s37 = sadd.s32 1, %s28
      %s38 = scalar_select %p35, %s37, %s28
      %p39 = scmp.ge.s32.totalorder %s38, 2
      %s40 = scalar_select %p39, 0, %s38
      %s41 = ssub.s32 %s28, %s40
      %s42 = ssub.s32 %s29, %s36
      %s43 = sor.u32 %s41, %s42
      %p44 = scmp.eq.s32.totalorder %s43, 0
      %s46 = sadd.s32 %s45, 1
      %s47 = scalar_select %p44, %s45, %s46
      %p50 = pneg %p44
      %p51 = scmp.eq.s32.totalorder %s21, 1
      %p52 = por %p50, %p51
      %p53 = scmp.ne.s32.totalorder %s45, %s48
      %p54 = scmp.eq.s32.totalorder %s21, 0
      %p55 = por %p53, %p54
      %p56 = scmp.ne.s32.totalorder %s45, %s48
      %p57 = scmp.eq.s32.totalorder %s26, 1
      %p58 = por %p56, %p57
      %p59 = scmp.ne.s32.totalorder %s48, %s49
      %p60 = scmp.eq.s32.totalorder %s26, 0
      %p61 = por %p59, %p60
      %p62 = scmp.ne.s32.totalorder %s48, %s49
      %p63 = scmp.eq.s32.totalorder %s27, 1
      %p64 = por %p62, %p63
      %p66 = scmp.ne.s32.totalorder %s49, %s65
      %p67 = scmp.eq.s32.totalorder %s27, 0
      %p68 = por %p66, %p67
      %s69 = ssub.s32 %s28, %s40
      %p70 = scmp.eq.s32.totalorder %s69, 0
      %s72 = sadd.s32 %s71, 1
      %s73 = scalar_select %p70, %s71, %s72
      %p76 = pneg %p70
      %p77 = scmp.eq.s32.totalorder %s21, 1
      %p78 = por %p76, %p77
      %p79 = scmp.ne.s32.totalorder %s71, %s74
      %p80 = scmp.eq.s32.totalorder %s21, 0
      %p81 = por %p79, %p80
      %p82 = scmp.ne.s32.totalorder %s71, %s74
      %p83 = scmp.eq.s32.totalorder %s26, 1
      %p84 = por %p82, %p83
      %p85 = scmp.ne.s32.totalorder %s74, %s75
      %p86 = scmp.eq.s32.totalorder %s26, 0
      %p87 = por %p85, %p86
      %p88 = scmp.ne.s32.totalorder %s74, %s75
      %p89 = scmp.eq.s32.totalorder %s27, 1
      %p90 = por %p88, %p89
      %p92 = scmp.ne.s32.totalorder %s75, %s91
      %p93 = scmp.eq.s32.totalorder %s27, 0
      %p94 = por %p92, %p93
      %s96 = sadd.s32 %s95, 1
      %p99 = scmp.eq.s32.totalorder %s21, 1
      %p100 = scmp.ne.s32.totalorder %s95, %s97
      %p101 = scmp.eq.s32.totalorder %s21, 0
      %p102 = por %p100, %p101
      %p103 = scmp.ne.s32.totalorder %s95, %s97
      %p104 = scmp.eq.s32.totalorder %s26, 1
      %p105 = por %p103, %p104
      %p106 = scmp.ne.s32.totalorder %s97, %s98
      %p107 = scmp.eq.s32.totalorder %s26, 0
      %p108 = por %p106, %p107
      %p109 = scmp.ne.s32.totalorder %s97, %s98
      %p110 = scmp.eq.s32.totalorder %s27, 1
      %p111 = por %p109, %p110
      %p113 = scmp.ne.s32.totalorder %s98, %s112
      %p114 = scmp.eq.s32.totalorder %s27, 0
      %p115 = por %p113, %p114
      %s117 = sadd.s32 %s116, 1
      %p120 = scmp.eq.s32.totalorder %s21, 1
      %p121 = scmp.ne.s32.totalorder %s116, %s118
      %p122 = scmp.eq.s32.totalorder %s21, 0
      %p123 = por %p121, %p122
      %p124 = scmp.ne.s32.totalorder %s116, %s118
      %p125 = scmp.eq.s32.totalorder %s26, 1
      %p126 = por %p124, %p125
      %p127 = scmp.ne.s32.totalorder %s118, %s119
      %p128 = scmp.eq.s32.totalorder %s26, 0
      %p129 = por %p127, %p128
      %p130 = scmp.ne.s32.totalorder %s118, %s119
      %p131 = scmp.eq.s32.totalorder %s27, 1
      %p132 = por %p130, %p131
      %p134 = scmp.ne.s32.totalorder %s119, %s133
      %p135 = scmp.eq.s32.totalorder %s27, 0
      %p136 = por %p134, %p135
      %s138 = sadd.s32 %s137, 1
      %p141 = scmp.eq.s32.totalorder %s21, 1
      %p142 = scmp.ne.s32.totalorder %s137, %s139
      %p143 = scmp.eq.s32.totalorder %s21, 0
      %p144 = por %p142, %p143
      %p145 = scmp.ne.s32.totalorder %s137, %s139
      %p146 = scmp.eq.s32.totalorder %s26, 1
      %p147 = por %p145, %p146
      %p148 = scmp.ne.s32.totalorder %s139, %s140
      %p149 = scmp.eq.s32.totalorder %s26, 0
      %p150 = por %p148, %p149
      %p151 = scmp.ne.s32.totalorder %s139, %s140
      %p152 = scmp.eq.s32.totalorder %s27, 1
      %p153 = por %p151, %p152
      %p155 = scmp.ne.s32.totalorder %s140, %s154
      %p156 = scmp.eq.s32.totalorder %s27, 0
      %p157 = por %p155, %p156
      %s159 = sadd.s32 %s158, 1
      %p162 = scmp.eq.s32.totalorder %s21, 1
      %p163 = scmp.ne.s32.totalorder %s158, %s160
      %p164 = scmp.eq.s32.totalorder %s21, 0
      %p165 = por %p163, %p164
      %p166 = scmp.ne.s32.totalorder %s158, %s160
      %p167 = scmp.eq.s32.totalorder %s26, 1
      %p168 = por %p166, %p167
      %p169 = scmp.ne.s32.totalorder %s160, %s161
      %p170 = scmp.eq.s32.totalorder %s26, 0
      %p171 = por %p169, %p170
      %p172 = scmp.ne.s32.totalorder %s160, %s161
      %p173 = scmp.eq.s32.totalorder %s27, 1
      %p174 = por %p172, %p173
      %p176 = scmp.ne.s32.totalorder %s161, %s175
      %p177 = scmp.eq.s32.totalorder %s27, 0
      %p178 = por %p176, %p177
      %s179 = ssub.s32 %s28, %s40
      %s180 = ssub.s32 %s29, %s36
      %s181 = sor.u32 %s179, %s180
      %p182 = scmp.eq.s32.totalorder %s181, 0
      %s184 = sadd.s32 %s183, 1
      %s185 = scalar_select %p182, %s183, %s184
      %p188 = pneg %p182
      %p189 = scmp.eq.s32.totalorder %s21, 1
      %p190 = por %p188, %p189
      %p191 = scmp.ne.s32.totalorder %s183, %s186
      %p192 = scmp.eq.s32.totalorder %s21, 0
      %p193 = por %p191, %p192
      %p194 = scmp.ne.s32.totalorder %s183, %s186
      %p195 = scmp.eq.s32.totalorder %s26, 1
      %p196 = por %p194, %p195
      %p197 = scmp.ne.s32.totalorder %s186, %s187
      %p198 = scmp.eq.s32.totalorder %s26, 0
      %p199 = por %p197, %p198
      %p200 = scmp.ne.s32.totalorder %s186, %s187
      %p201 = scmp.eq.s32.totalorder %s27, 1
      %p202 = por %p200, %p201
      %p204 = scmp.ne.s32.totalorder %s187, %s203
      %p205 = scmp.eq.s32.totalorder %s27, 0
      %p206 = por %p204, %p205
      %p207 = scmp.le.s32.totalorder 1, %s21
      %p208 = scmp.lt.s32.totalorder %s21, 3
      %p209 = pnand %p207, %p208
      %p210 = pneg %p209
      // Predicated region
      $region9: #{tpu_custom_call.1} parent=5 // pred_check
        _
      $region10: #{tpu_custom_call.1} parent=5 // pred_check_branch
        %212 = sbr.rel (%p209) target = $region12
      $region11: #{tpu_custom_call.1} parent=5 // pred_region
        %s213 = ssub.s32 %s21, 1
        // Predicated region
        $region13: #{tpu_custom_call.1} parent=11 // pred_check
          %p214 = pneg %p108
        $region14: #{tpu_custom_call.1} parent=11 // pred_check_branch
          %216 = sbr.rel (%p214) target = $region16
        $region15: #{tpu_custom_call.1} parent=11 // pred_region
          _
        $region16: #{tpu_custom_call.1} parent=11 // pred_fallthru
          _
        // Predicated region
        $region17: #{tpu_custom_call.1} parent=11 // pred_check
          %p217 = pneg %p129
        $region18: #{tpu_custom_call.1} parent=11 // pred_check_branch
          %219 = sbr.rel (%p217) target = $region20
        $region19: #{tpu_custom_call.1} parent=11 // pred_region
          _
        $region20: #{tpu_custom_call.1} parent=11 // pred_fallthru
          _
        // Predicated region
        $region21: #{tpu_custom_call.1} parent=11 // pred_check
          %p220 = pneg %p150
        $region22: #{tpu_custom_call.1} parent=11 // pred_check_branch
          %222 = sbr.rel (%p220) target = $region24
        $region23: #{tpu_custom_call.1} parent=11 // pred_region
          _
        $region24: #{tpu_custom_call.1} parent=11 // pred_fallthru
          _
        // Predicated region
        $region25: #{tpu_custom_call.1} parent=11 // pred_check
          %p223 = pneg %p171
        $region26: #{tpu_custom_call.1} parent=11 // pred_check_branch
          %225 = sbr.rel (%p223) target = $region28
        $region27: #{tpu_custom_call.1} parent=11 // pred_region
          _
        $region28: #{tpu_custom_call.1} parent=11 // pred_fallthru
          _
      $region12: #{tpu_custom_call.1} parent=5 // pred_fallthru
        _
      %p226 = scmp.lt.s32.totalorder %s21, 2
      // Predicated region
      $region29: #{tpu_custom_call.1} parent=5 // pred_check
        %p227 = pneg %p226
      $region30: #{tpu_custom_call.1} parent=5 // pred_check_branch
        %229 = sbr.rel (%p227) target = $region32
      $region31: #{tpu_custom_call.1} parent=5 // pred_region
        // Predicated region
        $region33: #{tpu_custom_call.1} parent=31 // pred_check
          %p230 = pneg %p55
        $region34: #{tpu_custom_call.1} parent=31 // pred_check_branch
          %232 = sbr.rel (%p230) target = $region36
        $region35: #{tpu_custom_call.1} parent=31 // pred_region
          %s233 = sand.u32 %s45, 1
          %s234 = scalar_lea.sflag [#allocation4], %s233
          %s235 = sand.u32 %s45, 1
          %s236 = smul.addr %s235, 8
          %s237 = scalar_lea.vmem [#allocation3], %s236
          %s239 = ssub.s32 128, 128
          %240 = vsyncadd %s234, %s239
          %s241 = smul.addr %s29, 2
          %s242 = smul.addr %s28, 2
          %s243 = sadd.s32 %s241, %s242
          %s244 = smul.addr %s243, 128
          %s245 = scalar_lea.hbm %s0, %s244
          %s247 = sshll.u32 %s237, 4
          %s248 = int_to_ptr.vmem [resolvable:$true] %s247
          %250 = dma.hbm_to_vmem [thread:$0]  %s245, 128, %s248, %s234
        $region36: #{tpu_custom_call.1} parent=31 // pred_fallthru
          _
        // Predicated region
        $region37: #{tpu_custom_call.1} parent=31 // pred_check
          %p251 = pneg %p81
        $region38: #{tpu_custom_call.1} parent=31 // pred_check_branch
          %253 = sbr.rel (%p251) target = $region40
        $region39: #{tpu_custom_call.1} parent=31 // pred_region
          %s254 = sand.u32 %s71, 1
          %s255 = scalar_lea.sflag [#allocation7], %s254
          %s256 = sand.u32 %s71, 1
          %s257 = smul.addr %s256, 8
          %s258 = scalar_lea.vmem [#allocation6], %s257
          %s260 = ssub.s32 128, 128
          %261 = vsyncadd %s255, %s260
          %s262 = smul.addr %s28, 2
          %s263 = sadd.s32 1, %s262
          %s264 = smul.addr %s263, 128
          %s265 = scalar_lea.hbm %s1, %s264
          %s267 = sshll.u32 %s258, 4
          %s268 = int_to_ptr.vmem [resolvable:$true] %s267
          %270 = dma.hbm_to_vmem [thread:$0]  %s265, 128, %s268, %s255
        $region40: #{tpu_custom_call.1} parent=31 // pred_fallthru
          _
      $region32: #{tpu_custom_call.1} parent=5 // pred_fallthru
        _
      %p271 = scmp.le.s32.totalorder 1, %s21
      %p272 = scmp.lt.s32.totalorder %s21, 3
      %p273 = pnand %p271, %p272
      %p274 = pneg %p273
      // Predicated region
      $region41: #{tpu_custom_call.1} parent=5 // pred_check
        _
      $region42: #{tpu_custom_call.1} parent=5 // pred_check_branch
        %276 = sbr.rel (%p273) target = $region44
      $region43: #{tpu_custom_call.1} parent=5 // pred_region
        %s277 = ssub.s32 %s21, 1
        %s278 = sand.u32 %s48, 1
        %s279 = scalar_lea.sflag [#allocation4], %s278
        %s280 = sand.u32 %s48, 1
        %s281 = smul.addr %s280, 8
        %s282 = scalar_lea.vmem [#allocation3], %s281
        // Predicated region
        $region45: #{tpu_custom_call.1} parent=43 // pred_check
          %p283 = pneg %p61
        $region46: #{tpu_custom_call.1} parent=43 // pred_check_branch
          %285 = sbr.rel (%p283) target = $region48
        $region47: #{tpu_custom_call.1} parent=43 // pred_region
          %286 = dma.done %s279, 128
        $region48: #{tpu_custom_call.1} parent=43 // pred_fallthru
          _
        %s287 = sand.u32 %s74, 1
        %s288 = scalar_lea.sflag [#allocation7], %s287
        %s289 = sand.u32 %s74, 1
        %s290 = smul.addr %s289, 8
        %s291 = scalar_lea.vmem [#allocation6], %s290
        // Predicated region
        $region49: #{tpu_custom_call.1} parent=43 // pred_check
          %p292 = pneg %p87
        $region50: #{tpu_custom_call.1} parent=43 // pred_check_branch
          %294 = sbr.rel (%p292) target = $region52
        $region51: #{tpu_custom_call.1} parent=43 // pred_region
          %295 = dma.done %s288, 128
        $region52: #{tpu_custom_call.1} parent=43 // pred_fallthru
          _
        %s296 = sand.u32 %s48, 1
        %s297 = scalar_lea.sflag [#allocation4], %s296
        %s298 = sand.u32 %s48, 1
        %s299 = smul.addr %s298, 8
        %s300 = scalar_lea.vmem [#allocation3], %s299
        %p301 = pneg %p61
        %p302 = pneg %p58
        %s303 = sand.u32 %s74, 1
        %s304 = scalar_lea.sflag [#allocation7], %s303
        %s305 = sand.u32 %s74, 1
        %s306 = smul.addr %s305, 8
        %s307 = scalar_lea.vmem [#allocation6], %s306
        %p308 = pneg %p87
        %p309 = pneg %p84
        %p310 = pneg %p108
        %p311 = pneg %p105
        %p312 = pneg %p129
        %p313 = pneg %p126
        %p314 = pneg %p150
        %p315 = pneg %p147
        %p316 = pneg %p171
        %p317 = pneg %p168
        %p318 = pneg %p199
        %p319 = pneg %p196
        %s320 = sand.u32 %s186, 1
        %s321 = scalar_lea.sflag [#allocation5], %s320
        %s322 = sand.u32 %s186, 1
        %s323 = smul.addr %s322, 8
        %s324 = scalar_lea.vmem [#allocation8], %s323
        %p325 = scmp.eq.s32.totalorder %s31, 0
        // Predicated region
        $region53: #{tpu_custom_call.1} parent=43 // pred_check
          %p326 = pneg %p325
        $region54: #{tpu_custom_call.1} parent=43 // pred_check_branch
          %328 = sbr.rel (%p326) target = $region56
        $region55: #{tpu_custom_call.1} parent=43 // pred_region
          %v329 = vld [vmem:[%s4] sm:$0x1]
          %v330 = vld [vmem:[%s5] sm:$0x1]
          %v331 = vld [vmem:[%s291] sm:$0xff]
          %332 = vadd.xlane.f32.xlu0 %v331
          %v333 = vpop.xlane.xlu0 %332
          %v334 = vmul.f32 %v333, 0.0078125
          %v335 = vsub.f32 %v331, %v334
          %v336 = vmul.f32 %v335, %v335
          %337 = vadd.xlane.f32.xlu0 %v336
          %v338 = vpop.xlane.xlu0 %337
          %v339 = vmul.f32 %v338, 0.0078125
          %v340 = vadd.f32 %v339, 1e-05
          %v341 = vrsqrt.pop %v340
          %v343 = vlaneseq
          %v344 = vshrl.u32 %v343, 7
          %v345 = vsub.s32 0, %v344
          %v346 = vrot.slane %v329, %v345
          %v348 = vmul.f32 %v341, %v346
          %v349 = vmul.f32 %v335, %v348
          %v351 = vlaneseq
          %v352 = vshrl.u32 %v351, 7
          %v353 = vsub.s32 0, %v352
          %v354 = vrot.slane %v330, %v353
          %v356 = vadd.f32 %v349, %v354
          %357 = vst [vmem:[#allocation2] sm:$0xff] %v356
        $region56: #{tpu_custom_call.1} parent=43 // pred_fallthru
          _
        %v358 = vld [vmem:[%s2] sm:$0xff]
        %v359 = vld [vmem:[#allocation2] sm:$0xff]
        %v360 = vld [vmem:[%s3] sm:$0xff]
        %362 = vset.pattern.permute.xlu0 0
        %363 = vperm.xlu0 %362, %v360
        %v364 = vpop.permute.xlu0 %363
        %vm366 = vcmask 64512
        %v368 = vsel %vm366, %v358, 0
        %370 = vmatprep.subr.mxu0 0.0
        %371 = vmatpush1.msra.mxu0 %v359
        %372 = vmatprep.subr.mxu0 0.0
        %373 = vmatpush1.msra.mxu0 0.0
        %374 = vmatprep.subr.mxu0 0.0
        %375 = vmatpush1.msra.mxu0 0.0
        %376 = vmatprep.subr.mxu0 0.0
        %377 = vmatpush1.msra.mxu0 0.0
        %378 = vmatprep.subr.mxu0 0.0
        %379 = vmatpush1.msra.mxu0 0.0
        %380 = vmatprep.subr.mxu0 0.0
        %381 = vmatpush1.msra.mxu0 0.0
        %382 = vmatprep.subr.mxu0 0.0
        %383 = vmatpush1.msra.mxu0 0.0
        %384 = vmatprep.subr.mxu0 0.0
        %385 = vmatpush1.msra.mxu0 0.0
        %386 = vmatprep.subr.mxu0 0.0
        %387 = vmatpush1.msra.mxu0 0.0
        %388 = vmatprep.subr.mxu0 0.0
        %389 = vmatpush1.msra.mxu0 0.0
        %390 = vmatprep.subr.mxu0 0.0
        %391 = vmatpush1.msra.mxu0 0.0
        %392 = vmatprep.subr.mxu0 0.0
        %393 = vmatpush1.msra.mxu0 0.0
        %394 = vmatprep.subr.mxu0 0.0
        %395 = vmatpush1.msra.mxu0 0.0
        %396 = vmatprep.subr.mxu0 0.0
        %397 = vmatpush1.msra.mxu0 0.0
        %398 = vmatprep.subr.mxu0 0.0
        %399 = vmatpush1.msra.mxu0 0.0
        %400 = vmatprep.subr.mxu0 0.0
        %401 = vmatpush1.msra.mxu0 0.0
        %402 = vmatprep.subr.mxu0 0.0
        %403 = vmatpush1.msra.mxu0 0.0
        %404 = vmatprep.subr.mxu0 0.0
        %405 = vmatpush1.msra.mxu0 0.0
        %406 = vmatprep.subr.mxu0 0.0
        %407 = vmatpush1.msra.mxu0 0.0
        %408 = vmatprep.subr.mxu0 0.0
        %409 = vmatpush1.msra.mxu0 0.0
        %410 = vmatprep.subr.mxu0 0.0
        %411 = vmatpush1.msra.mxu0 0.0
        %412 = vmatprep.subr.mxu0 0.0
        %413 = vmatpush1.msra.mxu0 0.0
        %414 = vmatprep.subr.mxu0 0.0
        %415 = vmatpush1.msra.mxu0 0.0
        %416 = vmatprep.subr.mxu0 0.0
        %417 = vmatpush1.msra.mxu0 0.0
        %418 = vmatprep.subr.mxu0 0.0
        %419 = vmatpush1.msra.mxu0 0.0
        %420 = vmatprep.subr.mxu0 0.0
        %421 = vmatpush1.msra.mxu0 0.0
        %422 = vmatprep.subr.mxu0 0.0
        %423 = vmatpush1.msra.mxu0 0.0
        %424 = vmatprep.subr.mxu0 0.0
        %425 = vmatpush1.msra.mxu0 0.0
        %426 = vmatprep.subr.mxu0 0.0
        %427 = vmatpush1.msra.mxu0 0.0
        %428 = vmatprep.subr.mxu0 0.0
        %429 = vmatpush1.msra.mxu0 0.0
        %430 = vmatprep.subr.mxu0 0.0
        %431 = vmatpush1.msra.mxu0 0.0
        %432 = vmatprep.subr.mxu0 0.0
        %433 = vmatpush1.msra.mxu0 0.0
        %434 = vmatprep.mubr.f32.mxu0 0.0
        %435 = vmatmul.mubr.f32.gmra.mrb[0].mxu0 %v368
        %v436 = vpop.f32.mrb[0].mxu0
        %v437 = vadd.f32 %v364, %v436
        %v438 = vpop.f32.mrb[0].mxu0
        %439 = vdwg.mxu0
        %v440 = vld [vmem:[%s282] sm:$0xff]
        %v441 = vmul.f32 %v440, %v437
        %442 = vst [vmem:[%s324] sm:$0xff] %v441
        %s443 = sand.u32 %s186, 1
        %s444 = scalar_lea.sflag [#allocation5], %s443
        %s445 = sand.u32 %s186, 1
        %s446 = smul.addr %s445, 8
        %s447 = scalar_lea.vmem [#allocation8], %s446
        // Predicated region
        $region57: #{tpu_custom_call.1} parent=43 // pred_check
          %p448 = pneg %p196
        $region58: #{tpu_custom_call.1} parent=43 // pred_check_branch
          %450 = sbr.rel (%p448) target = $region60
        $region59: #{tpu_custom_call.1} parent=43 // pred_region
          %s452 = ssub.s32 128, 128
          %453 = vsyncadd %s444, %s452
          %s454 = sadd.s32 %s31, %s30
          %s455 = smul.addr %s454, 128
          %s456 = scalar_lea.hbm %s6, %s455
          %s458 = sshll.u32 %s447, 4
          %s459 = int_to_ptr.vmem [resolvable:$true] %s458
          %461 = dma.vmem_to_hbm [thread:$0]  %s459, 128, %s456, %s444
        $region60: #{tpu_custom_call.1} parent=43 // pred_fallthru
          _
      $region44: #{tpu_custom_call.1} parent=5 // pred_fallthru
        _
      %p462 = scmp.le.s32.totalorder 2, %s21
      // Predicated region
      $region61: #{tpu_custom_call.1} parent=5 // pred_check
        %p463 = pneg %p462
      $region62: #{tpu_custom_call.1} parent=5 // pred_check_branch
        %465 = sbr.rel (%p463) target = $region64
      $region63: #{tpu_custom_call.1} parent=5 // pred_region
        %s466 = ssub.s32 %s21, 2
        // Predicated region
        $region65: #{tpu_custom_call.1} parent=63 // pred_check
          %p467 = pneg %p202
        $region66: #{tpu_custom_call.1} parent=63 // pred_check_branch
          %469 = sbr.rel (%p467) target = $region68
        $region67: #{tpu_custom_call.1} parent=63 // pred_region
          %s470 = sand.u32 %s187, 1
          %s471 = scalar_lea.sflag [#allocation5], %s470
          %s472 = sand.u32 %s187, 1
          %s473 = smul.addr %s472, 8
          %s474 = scalar_lea.vmem [#allocation8], %s473
          %475 = dma.done %s471, 128
        $region68: #{tpu_custom_call.1} parent=63 // pred_fallthru
          _
      $region64: #{tpu_custom_call.1} parent=5 // pred_fallthru
        _
    $region6: #{tpu_custom_call.1} parent=1 // loop_footer
      %s25 = sadd.s32 1, %s21
    $region7: #{tpu_custom_call.1} parent=1 // loop_footer_branch
      %20 = sbr.rel target = $region3
    $region8: #{tpu_custom_call.1} parent=1 // loop_exit
      _
    %476 = vsyncpa [#allocation4], 1
    %s477 = scalar_lea.sflag [#allocation4], 1
    %478 = vsyncpa %s477, 1
    %479 = vsyncpa [#allocation7], 1
    %s480 = scalar_lea.sflag [#allocation7], 1
    %481 = vsyncpa %s480, 1
    %482 = vsyncpa [#allocation5], 1
    %s483 = scalar_lea.sflag [#allocation5], 1
    %484 = vsyncpa %s483, 1

// kernel: tpu_custom_call.1
$region0: #{tpu_custom_call.1}
  #allocation0 [shape = 'u32[]', space=smem, size = 0x4, offset = 0x4, fixed_abs, tag = 'smem constant byte address 0x4 - core index']
  #allocation1 [shape = 'u32[144,128]{1,0:T(1,128)}', space=vmem, size = 0x12000, scoped, tag = 'internal scratch']
  #allocation2 [shape = 'f32[8,128]{1,0:T(8,128)}', space=vmem, size = 0x1000, scoped, tag = 'scratch operand']
  %s0 = inlined_call_operand.hbm [shape: f32[2,8,256], index: 0, kind: input, shape index: {}]
  %s1 = inlined_call_operand.hbm [shape: f32[2,8,256], index: 1, kind: input, shape index: {}]
  %s2 = inlined_call_operand.vmem [shape: f32[8,8], index: 2, kind: input, shape index: {}]
  %s3 = inlined_call_operand.vmem [shape: f32[8,1], index: 3, kind: input, shape index: {}]
  %s4 = inlined_call_operand.vmem [shape: f32[1,128], index: 4, kind: input, shape index: {}]
  %s5 = inlined_call_operand.vmem [shape: f32[1,128], index: 5, kind: input, shape index: {}]
  %s6 = inlined_call_operand.hbm [shape: f32[2,8,128], index: 6, kind: output, shape index: {}]
  %s7 = sld [smem:[#allocation0]]
  $region69: #{tpu_custom_call.1} parent=0
    _
  %s9 = ssub.s32 1, %s7
  %s10 = scalar_select 0, %s9, %s7
  $region1: #{tpu_custom_call.1} parent=0
    #allocation3 [shape = 'u8[8192]{0}', space=vmem, size = 0x2000, scoped, tag = 'input window, operand 0']
    #allocation4 [shape = 's32[2]{0}', space=sflag, size = 0x8, scoped, tag = 'scoped memory for tpu_custom_call.1']
    #allocation5 [shape = 's32[2]{0}', space=sflag, size = 0x8, scoped, tag = 'scoped memory for tpu_custom_call.1']
    #allocation6 [shape = 'u8[8192]{0}', space=vmem, size = 0x2000, scoped, tag = 'input window, operand 1']
    #allocation7 [shape = 's32[2]{0}', space=sflag, size = 0x8, scoped, tag = 'scoped memory for tpu_custom_call.1']
    #allocation8 [shape = 'u8[8192]{0}', space=vmem, size = 0x2000, scoped, tag = 'output window, operand 0']
    %11 = vsyncpa [#allocation4], 0
    %s12 = scalar_lea.sflag [#allocation4], 1
    %13 = vsyncpa %s12, 0
    %14 = vsyncpa [#allocation7], 0
    %s15 = scalar_lea.sflag [#allocation7], 1
    %16 = vsyncpa %s15, 0
    %17 = vsyncpa [#allocation5], 0
    %s18 = scalar_lea.sflag [#allocation5], 1
    %19 = vsyncpa %s18, 0
    loop: start=0, step=1, limit=4
    $region2: #{tpu_custom_call.1} parent=1 // loop_pre_header
      _
    $region3: #{tpu_custom_call.1} parent=1 // loop_header
      %s21 = sphi 0, %s25
      %p22 = scmp.ge.s32.totalorder %s21, 4
      %s28 = sphi 0, %s40
      %s29 = sphi 0, %s36
      %s30 = sphi 0, %s28
      %s31 = sphi 0, %s29
      %s32 = sphi 0, %s30
      %s33 = sphi 0, %s31
      %s45 = sphi 0, %s47
      %s48 = sphi 0, %s45
      %s49 = sphi 0, %s48
      %s65 = sphi 0, %s49
      %s71 = sphi 0, %s73
      %s74 = sphi 0, %s71
      %s75 = sphi 0, %s74
      %s91 = sphi 0, %s75
      %s95 = sphi 0, %s95
      %s97 = sphi 0, %s95
      %s98 = sphi 0, %s97
      %s112 = sphi 0, %s98
      %s116 = sphi 0, %s116
      %s118 = sphi 0, %s116
      %s119 = sphi 0, %s118
      %s133 = sphi 0, %s119
      %s137 = sphi 0, %s137
      %s139 = sphi 0, %s137
      %s140 = sphi 0, %s139
      %s154 = sphi 0, %s140
      %s158 = sphi 0, %s158
      %s160 = sphi 0, %s158
      %s161 = sphi 0, %s160
      %s175 = sphi 0, %s161
      %s183 = sphi 0, %s185
      %s186 = sphi 0, %s183
      %s187 = sphi 0, %s186
      %s203 = sphi 0, %s187
    $region4: #{tpu_custom_call.1} parent=1 // loop_header_branch
      %24 = sbr.rel (%p22) target = $region8
    $region5: #{tpu_custom_call.1} parent=1 // loop_body
      %s26 = ssub.s32 %s21, 1
      %s27 = ssub.s32 %s21, 2
      %s34 = sadd.s32 1, %s29
      %p35 = scmp.ge.s32.totalorder %s34, 1
      %s36 = scalar_select %p35, 0, %s34
      %s37 = sadd.s32 1, %s28
      %s38 = scalar_select %p35, %s37, %s28
      %p39 = scmp.ge.s32.totalorder %s38, 2
      %s40 = scalar_select %p39, 0, %s38
      %s41 = ssub.s32 %s28, %s40
      %s42 = ssub.s32 %s29, %s36
      %s43 = sor.u32 %s41, %s42
      %p44 = scmp.eq.s32.totalorder %s43, 0
      %s46 = sadd.s32 %s45, 1
      %s47 = scalar_select %p44, %s45, %s46
      %p50 = pneg %p44
      %p51 = scmp.eq.s32.totalorder %s21, 1
      %p52 = por %p50, %p51
      %p53 = scmp.ne.s32.totalorder %s45, %s48
      %p54 = scmp.eq.s32.totalorder %s21, 0
      %p55 = por %p53, %p54
      %p56 = scmp.ne.s32.totalorder %s45, %s48
      %p57 = scmp.eq.s32.totalorder %s26, 1
      %p58 = por %p56, %p57
      %p59 = scmp.ne.s32.totalorder %s48, %s49
      %p60 = scmp.eq.s32.totalorder %s26, 0
      %p61 = por %p59, %p60
      %p62 = scmp.ne.s32.totalorder %s48, %s49
      %p63 = scmp.eq.s32.totalorder %s27, 1
      %p64 = por %p62, %p63
      %p66 = scmp.ne.s32.totalorder %s49, %s65
      %p67 = scmp.eq.s32.totalorder %s27, 0
      %p68 = por %p66, %p67
      %s69 = ssub.s32 %s28, %s40
      %p70 = scmp.eq.s32.totalorder %s69, 0
      %s72 = sadd.s32 %s71, 1
      %s73 = scalar_select %p70, %s71, %s72
      %p76 = pneg %p70
      %p77 = scmp.eq.s32.totalorder %s21, 1
      %p78 = por %p76, %p77
      %p79 = scmp.ne.s32.totalorder %s71, %s74
      %p80 = scmp.eq.s32.totalorder %s21, 0
      %p81 = por %p79, %p80
      %p82 = scmp.ne.s32.totalorder %s71, %s74
      %p83 = scmp.eq.s32.totalorder %s26, 1
      %p84 = por %p82, %p83
      %p85 = scmp.ne.s32.totalorder %s74, %s75
      %p86 = scmp.eq.s32.totalorder %s26, 0
      %p87 = por %p85, %p86
      %p88 = scmp.ne.s32.totalorder %s74, %s75
      %p89 = scmp.eq.s32.totalorder %s27, 1
      %p90 = por %p88, %p89
      %p92 = scmp.ne.s32.totalorder %s75, %s91
      %p93 = scmp.eq.s32.totalorder %s27, 0
      %p94 = por %p92, %p93
      %s96 = sadd.s32 %s95, 1
      %p99 = scmp.eq.s32.totalorder %s21, 1
      %p100 = scmp.ne.s32.totalorder %s95, %s97
      %p101 = scmp.eq.s32.totalorder %s21, 0
      %p102 = por %p100, %p101
      %p103 = scmp.ne.s32.totalorder %s95, %s97
      %p104 = scmp.eq.s32.totalorder %s26, 1
      %p105 = por %p103, %p104
      %p106 = scmp.ne.s32.totalorder %s97, %s98
      %p107 = scmp.eq.s32.totalorder %s26, 0
      %p108 = por %p106, %p107
      %p109 = scmp.ne.s32.totalorder %s97, %s98
      %p110 = scmp.eq.s32.totalorder %s27, 1
      %p111 = por %p109, %p110
      %p113 = scmp.ne.s32.totalorder %s98, %s112
      %p114 = scmp.eq.s32.totalorder %s27, 0
      %p115 = por %p113, %p114
      %s117 = sadd.s32 %s116, 1
      %p120 = scmp.eq.s32.totalorder %s21, 1
      %p121 = scmp.ne.s32.totalorder %s116, %s118
      %p122 = scmp.eq.s32.totalorder %s21, 0
      %p123 = por %p121, %p122
      %p124 = scmp.ne.s32.totalorder %s116, %s118
      %p125 = scmp.eq.s32.totalorder %s26, 1
      %p126 = por %p124, %p125
      %p127 = scmp.ne.s32.totalorder %s118, %s119
      %p128 = scmp.eq.s32.totalorder %s26, 0
      %p129 = por %p127, %p128
      %p130 = scmp.ne.s32.totalorder %s118, %s119
      %p131 = scmp.eq.s32.totalorder %s27, 1
      %p132 = por %p130, %p131
      %p134 = scmp.ne.s32.totalorder %s119, %s133
      %p135 = scmp.eq.s32.totalorder %s27, 0
      %p136 = por %p134, %p135
      %s138 = sadd.s32 %s137, 1
      %p141 = scmp.eq.s32.totalorder %s21, 1
      %p142 = scmp.ne.s32.totalorder %s137, %s139
      %p143 = scmp.eq.s32.totalorder %s21, 0
      %p144 = por %p142, %p143
      %p145 = scmp.ne.s32.totalorder %s137, %s139
      %p146 = scmp.eq.s32.totalorder %s26, 1
      %p147 = por %p145, %p146
      %p148 = scmp.ne.s32.totalorder %s139, %s140
      %p149 = scmp.eq.s32.totalorder %s26, 0
      %p150 = por %p148, %p149
      %p151 = scmp.ne.s32.totalorder %s139, %s140
      %p152 = scmp.eq.s32.totalorder %s27, 1
      %p153 = por %p151, %p152
      %p155 = scmp.ne.s32.totalorder %s140, %s154
      %p156 = scmp.eq.s32.totalorder %s27, 0
      %p157 = por %p155, %p156
      %s159 = sadd.s32 %s158, 1
      %p162 = scmp.eq.s32.totalorder %s21, 1
      %p163 = scmp.ne.s32.totalorder %s158, %s160
      %p164 = scmp.eq.s32.totalorder %s21, 0
      %p165 = por %p163, %p164
      %p166 = scmp.ne.s32.totalorder %s158, %s160
      %p167 = scmp.eq.s32.totalorder %s26, 1
      %p168 = por %p166, %p167
      %p169 = scmp.ne.s32.totalorder %s160, %s161
      %p170 = scmp.eq.s32.totalorder %s26, 0
      %p171 = por %p169, %p170
      %p172 = scmp.ne.s32.totalorder %s160, %s161
      %p173 = scmp.eq.s32.totalorder %s27, 1
      %p174 = por %p172, %p173
      %p176 = scmp.ne.s32.totalorder %s161, %s175
      %p177 = scmp.eq.s32.totalorder %s27, 0
      %p178 = por %p176, %p177
      %s179 = ssub.s32 %s28, %s40
      %s180 = ssub.s32 %s29, %s36
      %s181 = sor.u32 %s179, %s180
      %p182 = scmp.eq.s32.totalorder %s181, 0
      %s184 = sadd.s32 %s183, 1
      %s185 = scalar_select %p182, %s183, %s184
      %p188 = pneg %p182
      %p189 = scmp.eq.s32.totalorder %s21, 1
      %p190 = por %p188, %p189
      %p191 = scmp.ne.s32.totalorder %s183, %s186
      %p192 = scmp.eq.s32.totalorder %s21, 0
      %p193 = por %p191, %p192
      %p194 = scmp.ne.s32.totalorder %s183, %s186
      %p195 = scmp.eq.s32.totalorder %s26, 1
      %p196 = por %p194, %p195
      %p197 = scmp.ne.s32.totalorder %s186, %s187
      %p198 = scmp.eq.s32.totalorder %s26, 0
      %p199 = por %p197, %p198
      %p200 = scmp.ne.s32.totalorder %s186, %s187
      %p201 = scmp.eq.s32.totalorder %s27, 1
      %p202 = por %p200, %p201
      %p204 = scmp.ne.s32.totalorder %s187, %s203
      %p205 = scmp.eq.s32.totalorder %s27, 0
      %p206 = por %p204, %p205
      %p207 = scmp.le.s32.totalorder 1, %s21
      %p208 = scmp.lt.s32.totalorder %s21, 3
      %p209 = pnand %p207, %p208
      %p210 = pneg %p209
      // Predicated region
      $region9: #{tpu_custom_call.1} parent=5 // pred_check
        _
      $region10: #{tpu_custom_call.1} parent=5 // pred_check_branch
        %212 = sbr.rel (%p209) target = $region12
      $region11: #{tpu_custom_call.1} parent=5 // pred_region
        %s213 = ssub.s32 %s21, 1
        // Predicated region
        $region13: #{tpu_custom_call.1} parent=11 // pred_check
          %p214 = pneg %p108
        $region14: #{tpu_custom_call.1} parent=11 // pred_check_branch
          %216 = sbr.rel (%p214) target = $region16
        $region15: #{tpu_custom_call.1} parent=11 // pred_region
          _
        $region16: #{tpu_custom_call.1} parent=11 // pred_fallthru
          _
        // Predicated region
        $region17: #{tpu_custom_call.1} parent=11 // pred_check
          %p217 = pneg %p129
        $region18: #{tpu_custom_call.1} parent=11 // pred_check_branch
          %219 = sbr.rel (%p217) target = $region20
        $region19: #{tpu_custom_call.1} parent=11 // pred_region
          _
        $region20: #{tpu_custom_call.1} parent=11 // pred_fallthru
          _
        // Predicated region
        $region21: #{tpu_custom_call.1} parent=11 // pred_check
          %p220 = pneg %p150
        $region22: #{tpu_custom_call.1} parent=11 // pred_check_branch
          %222 = sbr.rel (%p220) target = $region24
        $region23: #{tpu_custom_call.1} parent=11 // pred_region
          _
        $region24: #{tpu_custom_call.1} parent=11 // pred_fallthru
          _
        // Predicated region
        $region25: #{tpu_custom_call.1} parent=11 // pred_check
          %p223 = pneg %p171
        $region26: #{tpu_custom_call.1} parent=11 // pred_check_branch
          %225 = sbr.rel (%p223) target = $region28
        $region27: #{tpu_custom_call.1} parent=11 // pred_region
          _
        $region28: #{tpu_custom_call.1} parent=11 // pred_fallthru
          _
      $region12: #{tpu_custom_call.1} parent=5 // pred_fallthru
        _
      %p226 = scmp.lt.s32.totalorder %s21, 2
      // Predicated region
      $region29: #{tpu_custom_call.1} parent=5 // pred_check
        %p227 = pneg %p226
      $region30: #{tpu_custom_call.1} parent=5 // pred_check_branch
        %229 = sbr.rel (%p227) target = $region32
      $region31: #{tpu_custom_call.1} parent=5 // pred_region
        // Predicated region
        $region33: #{tpu_custom_call.1} parent=31 // pred_check
          %p230 = pneg %p55
        $region34: #{tpu_custom_call.1} parent=31 // pred_check_branch
          %232 = sbr.rel (%p230) target = $region36
        $region35: #{tpu_custom_call.1} parent=31 // pred_region
          %s233 = sand.u32 %s45, 1
          %s234 = scalar_lea.sflag [#allocation4], %s233
          %s235 = sand.u32 %s45, 1
          %s236 = smul.addr %s235, 8
          %s237 = scalar_lea.vmem [#allocation3], %s236
          %s239 = ssub.s32 128, 128
          %240 = vsyncadd %s234, %s239
          %s241 = smul.addr %s29, 2
          %s242 = smul.addr %s28, 2
          %s243 = sadd.s32 %s241, %s242
          %s244 = smul.addr %s243, 128
          %s245 = scalar_lea.hbm %s0, %s244
          %s247 = sshll.u32 %s237, 4
          %s248 = int_to_ptr.vmem [resolvable:$true] %s247
          %250 = dma.hbm_to_vmem [thread:$0]  %s245, 128, %s248, %s234
        $region36: #{tpu_custom_call.1} parent=31 // pred_fallthru
          _
        // Predicated region
        $region37: #{tpu_custom_call.1} parent=31 // pred_check
          %p251 = pneg %p81
        $region38: #{tpu_custom_call.1} parent=31 // pred_check_branch
          %253 = sbr.rel (%p251) target = $region40
        $region39: #{tpu_custom_call.1} parent=31 // pred_region
          %s254 = sand.u32 %s71, 1
          %s255 = scalar_lea.sflag [#allocation7], %s254
          %s256 = sand.u32 %s71, 1
          %s257 = smul.addr %s256, 8
          %s258 = scalar_lea.vmem [#allocation6], %s257
          %s260 = ssub.s32 128, 128
          %261 = vsyncadd %s255, %s260
          %s262 = smul.addr %s28, 2
          %s263 = sadd.s32 1, %s262
          %s264 = smul.addr %s263, 128
          %s265 = scalar_lea.hbm %s1, %s264
          %s267 = sshll.u32 %s258, 4
          %s268 = int_to_ptr.vmem [resolvable:$true] %s267
          %270 = dma.hbm_to_vmem [thread:$0]  %s265, 128, %s268, %s255
        $region40: #{tpu_custom_call.1} parent=31 // pred_fallthru
          _
      $region32: #{tpu_custom_call.1} parent=5 // pred_fallthru
        _
      %p271 = scmp.le.s32.totalorder 1, %s21
      %p272 = scmp.lt.s32.totalorder %s21, 3
      %p273 = pnand %p271, %p272
      %p274 = pneg %p273
      // Predicated region
      $region41: #{tpu_custom_call.1} parent=5 // pred_check
        _
      $region42: #{tpu_custom_call.1} parent=5 // pred_check_branch
        %276 = sbr.rel (%p273) target = $region44
      $region43: #{tpu_custom_call.1} parent=5 // pred_region
        %s277 = ssub.s32 %s21, 1
        %s278 = sand.u32 %s48, 1
        %s279 = scalar_lea.sflag [#allocation4], %s278
        %s280 = sand.u32 %s48, 1
        %s281 = smul.addr %s280, 8
        %s282 = scalar_lea.vmem [#allocation3], %s281
        // Predicated region
        $region45: #{tpu_custom_call.1} parent=43 // pred_check
          %p283 = pneg %p61
        $region46: #{tpu_custom_call.1} parent=43 // pred_check_branch
          %285 = sbr.rel (%p283) target = $region48
        $region47: #{tpu_custom_call.1} parent=43 // pred_region
          %286 = dma.done %s279, 128
        $region48: #{tpu_custom_call.1} parent=43 // pred_fallthru
          _
        %s287 = sand.u32 %s74, 1
        %s288 = scalar_lea.sflag [#allocation7], %s287
        %s289 = sand.u32 %s74, 1
        %s290 = smul.addr %s289, 8
        %s291 = scalar_lea.vmem [#allocation6], %s290
        // Predicated region
        $region49: #{tpu_custom_call.1} parent=43 // pred_check
          %p292 = pneg %p87
        $region50: #{tpu_custom_call.1} parent=43 // pred_check_branch
          %294 = sbr.rel (%p292) target = $region52
        $region51: #{tpu_custom_call.1} parent=43 // pred_region
          %295 = dma.done %s288, 128
        $region52: #{tpu_custom_call.1} parent=43 // pred_fallthru
          _
        %s296 = sand.u32 %s48, 1
        %s297 = scalar_lea.sflag [#allocation4], %s296
        %s298 = sand.u32 %s48, 1
        %s299 = smul.addr %s298, 8
        %s300 = scalar_lea.vmem [#allocation3], %s299
        %p301 = pneg %p61
        %p302 = pneg %p58
        %s303 = sand.u32 %s74, 1
        %s304 = scalar_lea.sflag [#allocation7], %s303
        %s305 = sand.u32 %s74, 1
        %s306 = smul.addr %s305, 8
        %s307 = scalar_lea.vmem [#allocation6], %s306
        %p308 = pneg %p87
        %p309 = pneg %p84
        %p310 = pneg %p108
        %p311 = pneg %p105
        %p312 = pneg %p129
        %p313 = pneg %p126
        %p314 = pneg %p150
        %p315 = pneg %p147
        %p316 = pneg %p171
        %p317 = pneg %p168
        %p318 = pneg %p199
        %p319 = pneg %p196
        %s320 = sand.u32 %s186, 1
        %s321 = scalar_lea.sflag [#allocation5], %s320
        %s322 = sand.u32 %s186, 1
        %s323 = smul.addr %s322, 8
        %s324 = scalar_lea.vmem [#allocation8], %s323
        %p325 = scmp.eq.s32.totalorder %s31, 0
        // Predicated region
        $region53: #{tpu_custom_call.1} parent=43 // pred_check
          %p326 = pneg %p325
        $region54: #{tpu_custom_call.1} parent=43 // pred_check_branch
          %328 = sbr.rel (%p326) target = $region56
        $region55: #{tpu_custom_call.1} parent=43 // pred_region
          %v329 = vld [vmem:[%s4] sm:$0x1]
          %v330 = vld [vmem:[%s5] sm:$0x1]
          %v331 = vld [vmem:[%s291] sm:$0xff]
          %332 = vadd.xlane.f32.xlu0 %v331
          %v333 = vpop.xlane.xlu0 %332
          %v334 = vmul.f32 %v333, 0.0078125
          %v335 = vsub.f32 %v331, %v334
          %v336 = vmul.f32 %v335, %v335
          %337 = vadd.xlane.f32.xlu0 %v336
          %v338 = vpop.xlane.xlu0 %337
          %v339 = vmul.f32 %v338, 0.0078125
          %v340 = vadd.f32 %v339, 1e-05
          %v341 = vrsqrt.pop %v340
          %v343 = vlaneseq
          %v344 = vshrl.u32 %v343, 7
          %v345 = vsub.s32 0, %v344
          %v346 = vrot.slane %v329, %v345
          %v348 = vmul.f32 %v341, %v346
          %v349 = vmul.f32 %v335, %v348
          %v351 = vlaneseq
          %v352 = vshrl.u32 %v351, 7
          %v353 = vsub.s32 0, %v352
          %v354 = vrot.slane %v330, %v353
          %v356 = vadd.f32 %v349, %v354
          %357 = vst [vmem:[#allocation2] sm:$0xff] %v356
        $region56: #{tpu_custom_call.1} parent=43 // pred_fallthru
          _
        %v358 = vld [vmem:[%s2] sm:$0xff]
        %v359 = vld [vmem:[#allocation2] sm:$0xff]
        %v360 = vld [vmem:[%s3] sm:$0xff]
        %362 = vset.pattern.permute.xlu0 0
        %363 = vperm.xlu0 %362, %v360
        %v364 = vpop.permute.xlu0 %363
        %vm366 = vcmask 64512
        %v368 = vsel %vm366, %v358, 0
        %370 = vmatprep.subr.mxu0 0.0
        %371 = vmatpush1.msra.mxu0 %v359
        %372 = vmatprep.subr.mxu0 0.0
        %373 = vmatpush1.msra.mxu0 0.0
        %374 = vmatprep.subr.mxu0 0.0
        %375 = vmatpush1.msra.mxu0 0.0
        %376 = vmatprep.subr.mxu0 0.0
        %377 = vmatpush1.msra.mxu0 0.0
        %378 = vmatprep.subr.mxu0 0.0
        %379 = vmatpush1.msra.mxu0 0.0
        %380 = vmatprep.subr.mxu0 0.0
        %381 = vmatpush1.msra.mxu0 0.0
        %382 = vmatprep.subr.mxu0 0.0
        %383 = vmatpush1.msra.mxu0 0.0
        %384 = vmatprep.subr.mxu0 0.0
        %385 = vmatpush1.msra.mxu0 0.0
        %386 = vmatprep.subr.mxu0 0.0
        %387 = vmatpush1.msra.mxu0 0.0
        %388 = vmatprep.subr.mxu0 0.0
        %389 = vmatpush1.msra.mxu0 0.0
        %390 = vmatprep.subr.mxu0 0.0
        %391 = vmatpush1.msra.mxu0 0.0
        %392 = vmatprep.subr.mxu0 0.0
        %393 = vmatpush1.msra.mxu0 0.0
        %394 = vmatprep.subr.mxu0 0.0
        %395 = vmatpush1.msra.mxu0 0.0
        %396 = vmatprep.subr.mxu0 0.0
        %397 = vmatpush1.msra.mxu0 0.0
        %398 = vmatprep.subr.mxu0 0.0
        %399 = vmatpush1.msra.mxu0 0.0
        %400 = vmatprep.subr.mxu0 0.0
        %401 = vmatpush1.msra.mxu0 0.0
        %402 = vmatprep.subr.mxu0 0.0
        %403 = vmatpush1.msra.mxu0 0.0
        %404 = vmatprep.subr.mxu0 0.0
        %405 = vmatpush1.msra.mxu0 0.0
        %406 = vmatprep.subr.mxu0 0.0
        %407 = vmatpush1.msra.mxu0 0.0
        %408 = vmatprep.subr.mxu0 0.0
        %409 = vmatpush1.msra.mxu0 0.0
        %410 = vmatprep.subr.mxu0 0.0
        %411 = vmatpush1.msra.mxu0 0.0
        %412 = vmatprep.subr.mxu0 0.0
        %413 = vmatpush1.msra.mxu0 0.0
        %414 = vmatprep.subr.mxu0 0.0
        %415 = vmatpush1.msra.mxu0 0.0
        %416 = vmatprep.subr.mxu0 0.0
        %417 = vmatpush1.msra.mxu0 0.0
        %418 = vmatprep.subr.mxu0 0.0
        %419 = vmatpush1.msra.mxu0 0.0
        %420 = vmatprep.subr.mxu0 0.0
        %421 = vmatpush1.msra.mxu0 0.0
        %422 = vmatprep.subr.mxu0 0.0
        %423 = vmatpush1.msra.mxu0 0.0
        %424 = vmatprep.subr.mxu0 0.0
        %425 = vmatpush1.msra.mxu0 0.0
        %426 = vmatprep.subr.mxu0 0.0
        %427 = vmatpush1.msra.mxu0 0.0
        %428 = vmatprep.subr.mxu0 0.0
        %429 = vmatpush1.msra.mxu0 0.0
        %430 = vmatprep.subr.mxu0 0.0
        %431 = vmatpush1.msra.mxu0 0.0
        %432 = vmatprep.subr.mxu0 0.0
        %433 = vmatpush1.msra.mxu0 0.0
        %434 = vmatprep.mubr.f32.mxu0 0.0
        %435 = vmatmul.mubr.f32.gmra.mrb[0].mxu0 %v368
        %v436 = vpop.f32.mrb[0].mxu0
        %v437 = vadd.f32 %v364, %v436
        %v438 = vpop.f32.mrb[0].mxu0
        %439 = vdwg.mxu0
        %v440 = vld [vmem:[%s282] sm:$0xff]
        %v441 = vmul.f32 %v440, %v437
        %442 = vst [vmem:[%s324] sm:$0xff] %v441
        %s443 = sand.u32 %s186, 1
        %s444 = scalar_lea.sflag [#allocation5], %s443
        %s445 = sand.u32 %s186, 1
        %s446 = smul.addr %s445, 8
        %s447 = scalar_lea.vmem [#allocation8], %s446
        // Predicated region
        $region57: #{tpu_custom_call.1} parent=43 // pred_check
          %p448 = pneg %p196
        $region58: #{tpu_custom_call.1} parent=43 // pred_check_branch
          %450 = sbr.rel (%p448) target = $region60
        $region59: #{tpu_custom_call.1} parent=43 // pred_region
          %s452 = ssub.s32 128, 128
          %453 = vsyncadd %s444, %s452
          %s454 = sadd.s32 %s31, %s30
          %s455 = smul.addr %s454, 128
          %s456 = scalar_lea.hbm %s6, %s455
          %s458 = sshll.u32 %s447, 4
          %s459 = int_to_ptr.vmem [resolvable:$true] %s458
          %461 = dma.vmem_to_hbm [thread:$0]  %s459, 128, %s456, %s444
        $region60: #{tpu_custom_call.1} parent=43 // pred_fallthru
          _
      $region44: #{tpu_custom_call.1} parent=5 // pred_fallthru
        _
      %p462 = scmp.le.s32.totalorder 2, %s21
      // Predicated region
      $region61: #{tpu_custom_call.1} parent=5 // pred_check
        %p463 = pneg %p462
      $region62: #{tpu_custom_call.1} parent=5 // pred_check_branch
        %465 = sbr.rel (%p463) target = $region64
      $region63: #{tpu_custom_call.1} parent=5 // pred_region
        %s466 = ssub.s32 %s21, 2
        // Predicated region
        $region65: #{tpu_custom_call.1} parent=63 // pred_check
          %p467 = pneg %p202
        $region66: #{tpu_custom_call.1} parent=63 // pred_check_branch
          %469 = sbr.rel (%p467) target = $region68
        $region67: #{tpu_custom_call.1} parent=63 // pred_region
          %s470 = sand.u32 %s187, 1
          %s471 = scalar_lea.sflag [#allocation5], %s470
          %s472 = sand.u32 %s187, 1
          %s473 = smul.addr %s472, 8
          %s474 = scalar_lea.vmem [#allocation8], %s473
          %475 = dma.done %s471, 128
        $region68: #{tpu_custom_call.1} parent=63 // pred_fallthru
          _
      $region64: #{tpu_custom_call.1} parent=5 // pred_fallthru
        _
    $region6: #{tpu_custom_call.1} parent=1 // loop_footer
      %s25 = sadd.s32 1, %s21
    $region7: #{tpu_custom_call.1} parent=1 // loop_footer_branch
      %20 = sbr.rel target = $region3
    $region8: #{tpu_custom_call.1} parent=1 // loop_exit
      _
    %476 = vsyncpa [#allocation4], 1
    %s477 = scalar_lea.sflag [#allocation4], 1
    %478 = vsyncpa %s477, 1
    %479 = vsyncpa [#allocation7], 1
    %s480 = scalar_lea.sflag [#allocation7], 1
    %481 = vsyncpa %s480, 1
    %482 = vsyncpa [#allocation5], 1
    %s483 = scalar_lea.sflag [#allocation5], 1
    %484 = vsyncpa %s483, 1

</llo_original>
